<compile_context>
chip_gen: v7x
topology: tpu7x:2x2x1
jax: 0.10.0
libtpu: 0.0.40
codegen_flags: <defaults>
</compile_context>

<pallas_src>
import functools

import jax
import jax.numpy as jnp
from jax import lax
from jax.experimental import pallas as pl
from jax.experimental.pallas import tpu as pltpu

EPS = 1e-5

STRIP_BUDGET_BYTES = 40 << 20   # target VMEM residency for pipelined strips
VMEM_LIMIT_BYTES = 56 << 20     # scoped VMEM limit; < 64 MiB so it fits v7x per-TC


def _round_up(x, m):
    return ((x + m - 1) // m) * m


# ---------------------------------------------------------------------------
# Fused single-pass kernel (full spatial extent resident per row strip).
# ---------------------------------------------------------------------------
def _adain_fused_kernel(x_ref, wb_ref, o_ref, *, inv_n):
    # x_ref : (rows, HWp)  strip of (sample, channel) instances, spatial on lanes
    # wb_ref: (rows, 2)    packed per-instance [weight, bias] (f32)
    # o_ref : (rows, HWp)
    x = x_ref[...].astype(jnp.float32)
    s = jnp.sum(x, axis=-1, keepdims=True)          # single sweep: sum
    sq = jnp.sum(x * x, axis=-1, keepdims=True)     #             + sum of squares
    mean = s * inv_n                                # inv_n = 1/true_hw (pad lanes are 0)
    var = sq * inv_n - mean * mean                  # biased variance
    inv_std = lax.rsqrt(jnp.maximum(var, 0.0) + EPS)
    wb = wb_ref[...]
    scale = wb[:, 0:1] * inv_std                    # (rows, 1)
    shift = wb[:, 1:2] - mean * scale               # (rows, 1)
    o_ref[...] = (x * scale + shift).astype(o_ref.dtype)


# ---------------------------------------------------------------------------
# Two-pass path for very large H*W (spatial axis tiled).
# ---------------------------------------------------------------------------
def _adain_stats_kernel(x_ref, wb_ref, stat_ref, sum_sc, sq_sc, *, inv_n):
    j = pl.program_id(1)

    @pl.when(j == 0)
    def _():
        sum_sc[...] = jnp.zeros_like(sum_sc)
        sq_sc[...] = jnp.zeros_like(sq_sc)

    x = x_ref[...].astype(jnp.float32)
    sum_sc[...] += jnp.sum(x, axis=-1, keepdims=True)
    sq_sc[...] += jnp.sum(x * x, axis=-1, keepdims=True)

    @pl.when(j == pl.num_programs(1) - 1)
    def _():
        mean = sum_sc[...] * inv_n
        var = sq_sc[...] * inv_n - mean * mean
        inv_std = lax.rsqrt(jnp.maximum(var, 0.0) + EPS)
        wb = wb_ref[...]
        scale = wb[:, 0:1] * inv_std
        shift = wb[:, 1:2] - mean * scale
        stat_ref[:, 0:1] = scale
        stat_ref[:, 1:2] = shift


def _adain_apply_kernel(x_ref, stat_ref, o_ref):
    x = x_ref[...].astype(jnp.float32)
    st = stat_ref[...]
    o_ref[...] = (x * st[:, 0:1] + st[:, 1:2]).astype(o_ref.dtype)


# ---------------------------------------------------------------------------
# Tiling policy
# ---------------------------------------------------------------------------
def _bytes_per_row(hw_p, in_itemsize, out_itemsize):
    # 2x input + 2x output buffers (double-buffered pipeline) per strip row,
    # plus an f32 temporary of the strip when the input is narrower than f32.
    extra_f32 = 4 if in_itemsize < 4 else 0
    return hw_p * (2 * in_itemsize + 2 * out_itemsize + extra_f32)


def _pick_row_tile(rows_p, per_row_bytes, budget):
    budget_rows = max(8, (budget // per_row_bytes) // 8 * 8)
    tile = min(rows_p, budget_rows)
    # Keep >= 2 grid steps whenever possible so the "parallel" axis can shard
    # across v7x's two TensorCores (no-op on single-TC v5e/v6e).
    if rows_p >= 16:
        tile = min(tile, max(8, (rows_p // 2) // 8 * 8))
    while rows_p % tile != 0:          # rows_p is a multiple of 8 -> terminates
        tile -= 8
    return tile


def _pick_hw_tile(hw_p, row_tile, per_elem_bytes, budget):
    budget_cols = max(128, (budget // (row_tile * per_elem_bytes)) // 128 * 128)
    tile = min(hw_p, budget_cols)
    while hw_p % tile != 0:            # hw_p is a multiple of 128 -> terminates
        tile -= 128
    return tile


# ---------------------------------------------------------------------------
# Wrapper
# ---------------------------------------------------------------------------
def adain_forward(x_nchw, weight, bias):
    """AdaptiveInstanceNorm2d forward.

    x_nchw : (B, C, H, W)
    weight : (B*C,) per-(sample, channel) scale (assigned externally, AdaIN)
    bias   : (B*C,) per-(sample, channel) shift
    """
    B, C, H, W = x_nchw.shape
    rows, hw = B * C, H * W
    out_dtype = x_nchw.dtype
    in_itemsize = jnp.dtype(x_nchw.dtype).itemsize
    out_itemsize = jnp.dtype(out_dtype).itemsize

    rows_p = _round_up(rows, 8)        # keep the (8,128)-aligned tiled path
    hw_p = _round_up(hw, 128)          # lane-dense output even for 7x7/14x14 maps

    x2d = x_nchw.reshape(rows, hw)
    wb = jnp.stack([weight.astype(jnp.float32),
                    bias.astype(jnp.float32)], axis=-1)          # (rows, 2)
    if rows_p != rows or hw_p != hw:
        x2d = jnp.pad(x2d, ((0, rows_p - rows), (0, hw_p - hw)))
    if rows_p != rows:
        wb = jnp.pad(wb, ((0, rows_p - rows), (0, 0)))

    inv_n = 1.0 / float(hw)            # true spatial size (padding lanes are zero)
    per_row = _bytes_per_row(hw_p, in_itemsize, out_itemsize)

    if 8 * per_row <= STRIP_BUDGET_BYTES:
        # ---- fused single-pass path: full spatial extent resident per strip
        row_tile = _pick_row_tile(rows_p, per_row, STRIP_BUDGET_BYTES)
        grid = (rows_p // row_tile,)
        out2d = pl.pallas_call(
            functools.partial(_adain_fused_kernel, inv_n=inv_n),
            out_shape=jax.ShapeDtypeStruct((rows_p, hw_p), out_dtype),
            grid_spec=pltpu.PrefetchScalarGridSpec(
                num_scalar_prefetch=0,
                grid=grid,
                in_specs=[
                    pl.BlockSpec((row_tile, hw_p), lambda i: (i, 0)),
                    pl.BlockSpec((row_tile, 2), lambda i: (i, 0)),
                ],
                out_specs=pl.BlockSpec((row_tile, hw_p), lambda i: (i, 0)),
            ),
            compiler_params=pltpu.CompilerParams(
                dimension_semantics=("parallel",),
                vmem_limit_bytes=VMEM_LIMIT_BYTES),
        )(x2d, wb)
    else:
        # ---- two-pass path for very large H*W: tile the spatial axis.
        per_elem = 2 * in_itemsize + 2 * out_itemsize + (4 if in_itemsize < 4 else 0)
        row_tile = min(rows_p, 256)
        while rows_p % row_tile != 0:
            row_tile -= 8
        hw_tile = _pick_hw_tile(hw_p, row_tile, per_elem, STRIP_BUDGET_BYTES)
        grid = (rows_p // row_tile, hw_p // hw_tile)

        stats = pl.pallas_call(
            functools.partial(_adain_stats_kernel, inv_n=inv_n),
            out_shape=jax.ShapeDtypeStruct((rows_p, 2), jnp.float32),
            grid_spec=pltpu.PrefetchScalarGridSpec(
                num_scalar_prefetch=0,
                grid=grid,
                in_specs=[
                    pl.BlockSpec((row_tile, hw_tile), lambda i, j: (i, j)),
                    pl.BlockSpec((row_tile, 2), lambda i, j: (i, 0)),
                ],
                out_specs=pl.BlockSpec((row_tile, 2), lambda i, j: (i, 0)),
                scratch_shapes=[pltpu.VMEM((row_tile, 1), jnp.float32),
                                pltpu.VMEM((row_tile, 1), jnp.float32)],
            ),
            compiler_params=pltpu.CompilerParams(
                dimension_semantics=("parallel", "arbitrary"),
                vmem_limit_bytes=VMEM_LIMIT_BYTES),
        )(x2d, wb)

        out2d = pl.pallas_call(
            _adain_apply_kernel,
            out_shape=jax.ShapeDtypeStruct((rows_p, hw_p), out_dtype),
            grid_spec=pltpu.PrefetchScalarGridSpec(
                num_scalar_prefetch=0,
                grid=grid,
                in_specs=[
                    pl.BlockSpec((row_tile, hw_tile), lambda i, j: (i, j)),
                    pl.BlockSpec((row_tile, 2), lambda i, j: (i, 0)),
                ],
                out_specs=pl.BlockSpec((row_tile, hw_tile), lambda i, j: (i, j)),
            ),
            compiler_params=pltpu.CompilerParams(
                dimension_semantics=("parallel", "parallel"),
                vmem_limit_bytes=VMEM_LIMIT_BYTES),
        )(x2d, stats)

    out2d = out2d[:rows, :hw]          # drop row / lane padding (no-op if unpadded)
    return out2d.reshape(B, C, H, W)


def _ref_adain(x, weight, bias):
    """Pure-JAX reference matching PyTorch's training-mode batch_norm math."""
    B, C, H, W = x.shape
    m = jnp.mean(x, axis=(2, 3), keepdims=True)
    v = jnp.mean((x - m) ** 2, axis=(2, 3), keepdims=True)   # biased variance
    xn = (x - m) / jnp.sqrt(v + EPS)
    return xn * weight.reshape(B, C, 1, 1) + bias.reshape(B, C, 1, 1)


if __name__ == "__main__":
    B, C, H, W = 2, 4, 16, 16
    key = jax.random.PRNGKey(0)
    kx, kw, kb = jax.random.split(key, 3)

    x = jax.random.normal(kx, (B, C, H, W), dtype=jnp.float32)
    # AdaIN params are assigned per (sample, channel) before the call.
    weight = 1.0 + 0.5 * jax.random.normal(kw, (B * C,), dtype=jnp.float32)
    bias = 0.1 * jax.random.normal(kb, (B * C,), dtype=jnp.float32)

    out = jax.block_until_ready(adain_forward(x, weight, bias))
    ref = jax.block_until_ready(_ref_adain(x, weight, bias))

    assert out.shape == (B, C, H, W)
    assert jnp.allclose(out, ref, rtol=1e-4, atol=1e-4), "mismatch vs JAX reference"
    print("KERNEL_OK")
</pallas_src>

<mosaic_0001>
module attributes {stable_mosaic.version = 11 : i64} {
  func.func @_adain_fused_kernel(%arg0: i32, %arg1: memref<8x256xf32, #tpu.memory_space<vmem>>, %arg2: memref<8x2xf32, #tpu.memory_space<vmem>>, %arg3: memref<8x256xf32, #tpu.memory_space<vmem>>) attributes {dimension_semantics = [#tpu.dimension_semantics<parallel>], iteration_bounds = array<i64: 1>, scalar_prefetch = 0 : i64, scratch_operands = 0 : i64, tpu.core_type = #tpu.core_type<tc>, window_params = [{transform_indices = @transform_0, window_bounds = array<i64: 8, 256>}, {transform_indices = @transform_1, window_bounds = array<i64: 8, 2>}, {transform_indices = @transform_2, window_bounds = array<i64: 8, 256>}]} {
    %c0 = arith.constant 0 : index
    %c0_0 = arith.constant 0 : index
    %0 = vector.load %arg1[%c0, %c0_0] : memref<8x256xf32, #tpu.memory_space<vmem>>, vector<8x256xf32>
    %cst = arith.constant dense<0.000000e+00> : vector<8xf32>
    %1 = vector.multi_reduction <add>, %0, %cst [1] : vector<8x256xf32> to vector<8xf32>
    %2 = vector.shape_cast %1 : vector<8xf32> to vector<8x1xf32>
    %3 = arith.mulf %0, %0 : vector<8x256xf32>
    %cst_1 = arith.constant dense<0.000000e+00> : vector<8xf32>
    %4 = vector.multi_reduction <add>, %3, %cst_1 [1] : vector<8x256xf32> to vector<8xf32>
    %5 = vector.shape_cast %4 : vector<8xf32> to vector<8x1xf32>
    %cst_2 = arith.constant 3.906250e-03 : f32
    %6 = vector.broadcast %cst_2 : f32 to vector<8x1xf32>
    %7 = arith.mulf %2, %6 : vector<8x1xf32>
    %cst_3 = arith.constant 3.906250e-03 : f32
    %8 = vector.broadcast %cst_3 : f32 to vector<8x1xf32>
    %9 = arith.mulf %5, %8 : vector<8x1xf32>
    %10 = arith.mulf %7, %7 : vector<8x1xf32>
    %11 = arith.subf %9, %10 : vector<8x1xf32>
    %cst_4 = arith.constant 0.000000e+00 : f32
    %12 = vector.broadcast %cst_4 : f32 to vector<8x1xf32>
    %13 = arith.maximumf %11, %12 : vector<8x1xf32>
    %cst_5 = arith.constant 9.99999974E-6 : f32
    %14 = vector.broadcast %cst_5 : f32 to vector<8x1xf32>
    %15 = arith.addf %13, %14 : vector<8x1xf32>
    %16 = math.rsqrt %15 : vector<8x1xf32>
    %c0_6 = arith.constant 0 : index
    %c0_7 = arith.constant 0 : index
    %17 = vector.load %arg2[%c0_6, %c0_7] : memref<8x2xf32, #tpu.memory_space<vmem>>, vector<8x2xf32>
    %18 = vector.extract_strided_slice %17 {offsets = [0, 0], sizes = [8, 1], strides = [1, 1]} : vector<8x2xf32> to vector<8x1xf32>
    %19 = arith.mulf %18, %16 : vector<8x1xf32>
    %20 = vector.extract_strided_slice %17 {offsets = [0, 1], sizes = [8, 1], strides = [1, 1]} : vector<8x2xf32> to vector<8x1xf32>
    %21 = arith.mulf %7, %19 : vector<8x1xf32>
    %22 = arith.subf %20, %21 : vector<8x1xf32>
    %23 = vector.broadcast %19 : vector<8x1xf32> to vector<8x256xf32>
    %24 = arith.mulf %0, %23 : vector<8x256xf32>
    %25 = vector.broadcast %22 : vector<8x1xf32> to vector<8x256xf32>
    %26 = arith.addf %24, %25 : vector<8x256xf32>
    %c0_8 = arith.constant 0 : index
    %c0_9 = arith.constant 0 : index
    %27 = vector.load %arg3[%c0_8, %c0_9] : memref<8x256xf32, #tpu.memory_space<vmem>>, vector<8x256xf32>
    tpu.vector_store %arg3[%c0_8, %c0_9], %26 {strides = array<i32>} : memref<8x256xf32, #tpu.memory_space<vmem>>, vector<8x256xf32>,
    return
  }
  func.func @transform_0(%arg0: i32) -> (i32, i32) {
    %c0_i32 = arith.constant 0 : i32
    %c0_i32_0 = arith.constant 0 : i32
    return %arg0, %c0_i32 : i32, i32
  }
  func.func @transform_1(%arg0: i32) -> (i32, i32) {
    %c0_i32 = arith.constant 0 : i32
    %c0_i32_0 = arith.constant 0 : i32
    return %arg0, %c0_i32 : i32, i32
  }
  func.func @transform_2(%arg0: i32) -> (i32, i32) {
    %c0_i32 = arith.constant 0 : i32
    %c0_i32_0 = arith.constant 0 : i32
    return %arg0, %c0_i32 : i32, i32
  }
}

</mosaic_0001>

<llo_original>
// kernel: tpu_custom_call.1
$region0: #{tpu_custom_call.1}
  #allocation0 [shape = 'u32[]', space=smem, size = 0x4, offset = 0x4, fixed_abs, tag = 'smem constant byte address 0x4 - core index']
  #allocation1 [shape = 'u32[144,128]{1,0:T(1,128)}', space=vmem, size = 0x12000, scoped, tag = 'internal scratch']
  %s0 = inlined_call_operand.hbm [shape: f32[8,256], index: 0, kind: input, shape index: {}]
  %s1 = inlined_call_operand.vmem [shape: f32[8,2], index: 1, kind: input, shape index: {}]
  %s2 = inlined_call_operand.hbm [shape: f32[8,256], index: 2, kind: output, shape index: {}]
  %s3 = sld [smem:[#allocation0]]
  $region22: #{tpu_custom_call.1} parent=0
    _
  %s5 = ssub.s32 1, %s3
  %s6 = scalar_select 0, %s5, %s3
  $region1: #{tpu_custom_call.1} parent=0
    #allocation2 [shape = 'u8[8192]{0}', space=vmem, size = 0x2000, scoped, tag = 'input window, operand 0, single buffered']
    #allocation3 [shape = 's32[1]{0}', space=sflag, size = 0x4, scoped, tag = 'scoped memory for tpu_custom_call.1']
    #allocation4 [shape = 's32[1]{0}', space=sflag, size = 0x4, scoped, tag = 'scoped memory for tpu_custom_call.1']
    #allocation5 [shape = 'u8[8192]{0}', space=vmem, size = 0x2000, scoped, tag = 'output window, operand 0, single buffered']
    %7 = vsyncpa [#allocation3], 0
    %8 = vsyncpa [#allocation4], 0
    // Predicated region
    $region2: #{tpu_custom_call.1} parent=1 // pred_check
      _
    $region3: #{tpu_custom_call.1} parent=1 // pred_check_branch
      %10 = sbr.rel (0) target = $region5
    $region4: #{tpu_custom_call.1} parent=1 // pred_region
      %s12 = ssub.s32 256, 256
      %13 = vsyncadd [#allocation3], %s12
      %s15 = sshll.u32 [#allocation2], 4
      %s16 = int_to_ptr.vmem [resolvable:$true] %s15
      %18 = dma.hbm_to_vmem [thread:$0]  %s0, 256, %s16, [#allocation3]
    $region5: #{tpu_custom_call.1} parent=1 // pred_fallthru
      _
    // Predicated region
    $region6: #{tpu_custom_call.1} parent=1 // pred_check
      _
    $region7: #{tpu_custom_call.1} parent=1 // pred_check_branch
      %20 = sbr.rel (0) target = $region9
    $region8: #{tpu_custom_call.1} parent=1 // pred_region
      _
    $region9: #{tpu_custom_call.1} parent=1 // pred_fallthru
      _
    // Predicated region
    $region10: #{tpu_custom_call.1} parent=1 // pred_check
      _
    $region11: #{tpu_custom_call.1} parent=1 // pred_check_branch
      %22 = sbr.rel (0) target = $region13
    $region12: #{tpu_custom_call.1} parent=1 // pred_region
      %23 = dma.done [#allocation3], 256
    $region13: #{tpu_custom_call.1} parent=1 // pred_fallthru
      _
    %v24 = vld [vmem:[#allocation2] sm:$0xff]
    %v25 = vld [vmem:[#allocation2 + $0x8] sm:$0xff]
    %v26 = vadd.f32 %v24, %v25
    %27 = vadd.xlane.f32.xlu0 %v26
    %v28 = vpop.xlane.xlu0 %27
    %v29 = vmul.f32 %v24, %v24
    %v30 = vmul.f32 %v25, %v25
    %v31 = vadd.f32 %v29, %v30
    %32 = vadd.xlane.f32.xlu0 %v31
    %v33 = vpop.xlane.xlu0 %32
    %v34 = vmul.f32 %v28, 0.00390625
    %v35 = vmul.f32 %v33, 0.00390625
    %v36 = vmul.f32 %v34, %v34
    %v37 = vsub.f32 %v35, %v36
    %v38 = vmax.f32 %v37, 0.0
    %v39 = vadd.f32 %v38, 1e-05
    %v40 = vrsqrt.pop %v39
    %v41 = vld [vmem:[%s1] sm:$0xff]
    %v42 = vmul.f32 %v41, %v40
    %v43 = vmul.f32 %v34, %v42
    %45 = vrot.lane.b32.xlu0 %v43, 1
    %v46 = vpop.permute.xlu0 %45
    %v48 = vsub.f32 %v41, %v46
    %50 = vset.pattern.permute.xlu0 0
    %51 = vperm.xlu0 %50, %v42
    %v52 = vpop.permute.xlu0 %51
    %v54 = vmul.f32 %v24, %v52
    %v55 = vmul.f32 %v25, %v52
    %57 = vset.pattern.permute.xlu0 1
    %58 = vperm.xlu0 %57, %v48
    %v59 = vpop.permute.xlu0 %58
    %v61 = vadd.f32 %v54, %v59
    %v62 = vadd.f32 %v55, %v59
    %63 = vst [vmem:[#allocation5] sm:$0xff] %v61
    %64 = vst [vmem:[#allocation5 + $0x8] sm:$0xff] %v62
    // Predicated region
    $region14: #{tpu_custom_call.1} parent=1 // pred_check
      _
    $region15: #{tpu_custom_call.1} parent=1 // pred_check_branch
      %66 = sbr.rel (0) target = $region17
    $region16: #{tpu_custom_call.1} parent=1 // pred_region
      %s68 = ssub.s32 256, 256
      %69 = vsyncadd [#allocation4], %s68
      %s71 = sshll.u32 [#allocation5], 4
      %s72 = int_to_ptr.vmem [resolvable:$true] %s71
      %74 = dma.vmem_to_hbm [thread:$0]  %s72, 256, %s2, [#allocation4]
    $region17: #{tpu_custom_call.1} parent=1 // pred_fallthru
      _
    // Predicated region
    $region18: #{tpu_custom_call.1} parent=1 // pred_check
      _
    $region19: #{tpu_custom_call.1} parent=1 // pred_check_branch
      %76 = sbr.rel (0) target = $region21
    $region20: #{tpu_custom_call.1} parent=1 // pred_region
      %77 = dma.done [#allocation4], 256
    $region21: #{tpu_custom_call.1} parent=1 // pred_fallthru
      _
    %78 = vsyncpa [#allocation3], 1
    %79 = vsyncpa [#allocation4], 1

</llo_original>
